<compile_context>
chip_gen: v7x
topology: tpu7x:2x2x1
jax: 0.10.0
libtpu: 0.0.40
codegen_flags: <defaults>
</compile_context>

<pallas_src>
import jax
import jax.numpy as jnp
from jax.experimental import pallas as pl
from jax.experimental.pallas import tpu as pltpu

PACK = 64  # rows folded into the lane axis: 64*4 = 256 in-lanes, 64*2 = 128 out-lanes


def linear_packed_kernel(x_ref, w_ref, b_ref, o_ref):
    # [tile, 256] @ [256, 128] on the MXU with f32 accumulate, lane-dense bias
    # add on the VPU, single dtype cast at the (unmasked, 128-lane-wide) store.
    acc = jnp.dot(x_ref[...], w_ref[...], preferred_element_type=jnp.float32)
    o_ref[...] = (acc + b_ref[...]).astype(o_ref.dtype)


def linear_pallas(x, weight, bias, *, block_rows=2048):
    """y = x @ weight.T + bias   (x: [batch, in], weight: [out, in], bias: [out])."""
    batch, in_features = x.shape
    out_features = weight.shape[0]
    pack = PACK
    in_lanes = pack * in_features     # 256
    out_lanes = pack * out_features   # 128

    # ---- pack the batch into the lane axis (pure row-major reshapes, free) ----
    padded_batch = pl.cdiv(batch, pack) * pack
    if padded_batch != batch:
        x = jnp.pad(x, ((0, padded_batch - batch), (0, 0)))
    packed_rows = padded_batch // pack
    x_packed = x.reshape(packed_rows, in_lanes)                      # [R, 256]

    # Block-diagonal weight: 64 copies of the [4, 2] W along the diagonal.
    w_t = weight.T.astype(jnp.float32)                               # [in, out]
    w_bd = jnp.kron(jnp.eye(pack, dtype=jnp.float32), w_t)           # [256, 128]
    b_packed = jnp.tile(bias.astype(jnp.float32), pack)[None, :]     # [1, 128] f32

    # ---- row tiling ----
    # Big tiles to amortize per-step overhead (mem-bound kernel); multiple of 8.
    tile_rows = min(block_rows, packed_rows)
    if packed_rows > 16 and pl.cdiv(packed_rows, tile_rows) < 2:
        # Force >= 2 grid steps so v7x megacore can shard across both TCs.
        tile_rows = (((packed_rows + 1) // 2) + 7) // 8 * 8
    grid = (pl.cdiv(packed_rows, tile_rows),)

    y_packed = pl.pallas_call(
        linear_packed_kernel,
        out_shape=jax.ShapeDtypeStruct((packed_rows, out_lanes), x.dtype),
        grid_spec=pltpu.PrefetchScalarGridSpec(
            num_scalar_prefetch=0,
            grid=grid,
            in_specs=[
                # x: streamed per grid step (double-buffered by Pallas).
                pl.BlockSpec((tile_rows, in_lanes), lambda i: (i, 0)),
                # block-diagonal weight: same block every step -> VMEM-resident.
                pl.BlockSpec((in_lanes, out_lanes), lambda i: (0, 0)),
                # packed bias: same block every step -> VMEM-resident.
                pl.BlockSpec((1, out_lanes), lambda i: (0, 0)),
            ],
            out_specs=pl.BlockSpec((tile_rows, out_lanes), lambda i: (i, 0)),
        ),
        compiler_params=pltpu.CompilerParams(
            dimension_semantics=("parallel",),     # megacore sharding on v7x
            vmem_limit_bytes=48 * 1024 * 1024,     # > v5e 16 MiB default, < v7x 64 MiB
        ),
    )(x_packed, w_bd, b_packed)

    # Unpack (free reshape) and drop the padded rows.
    return y_packed.reshape(padded_batch, out_features)[:batch]


def init_params(key, in_features=4, out_features=2, dtype=jnp.float32):
    # Deterministic init mimicking PyTorch Linear defaults:
    # weight, bias ~ U(-1/sqrt(in_features), 1/sqrt(in_features))
    kw, kb = jax.random.split(key)
    bound = 1.0 / (in_features ** 0.5)
    weight = jax.random.uniform(kw, (out_features, in_features), dtype,
                                minval=-bound, maxval=bound)   # PyTorch [out, in]
    bias = jax.random.uniform(kb, (out_features,), dtype,
                              minval=-bound, maxval=bound)
    return weight, bias


if __name__ == "__main__":
    key = jax.random.PRNGKey(0)
    k_x_small, k_x_big, k_p = jax.random.split(key, 3)

    in_features, out_features = 4, 2
    weight, bias = init_params(k_p, in_features, out_features)

    # --- small-batch path (one packed row, single grid step) ---
    batch_small = 8
    x_small = jax.random.normal(k_x_small, (batch_small, in_features), jnp.float32)
    y_small = linear_pallas(x_small, weight, bias)
    jax.block_until_ready(y_small)
    ref_small = x_small @ weight.T + bias
    assert y_small.shape == (batch_small, out_features)
    assert jnp.allclose(y_small, ref_small, atol=1e-5, rtol=1e-5)

    # --- non-multiple-of-64 batch: exercises padding, packing, and a >=2-step grid ---
    batch_big = 1100
    x_big = jax.random.normal(k_x_big, (batch_big, in_features), jnp.float32)
    y_big = linear_pallas(x_big, weight, bias)
    jax.block_until_ready(y_big)
    ref_big = x_big @ weight.T + bias
    assert y_big.shape == (batch_big, out_features)
    assert jnp.allclose(y_big, ref_big, atol=1e-5, rtol=1e-5)

    print("KERNEL_OK")
</pallas_src>

<mosaic_0001>
module attributes {stable_mosaic.version = 11 : i64} {
  func.func @linear_packed_kernel(%arg0: i32, %arg1: memref<1x256xf32, #tpu.memory_space<vmem>>, %arg2: memref<256x128xf32, #tpu.memory_space<vmem>>, %arg3: memref<1x128xf32, #tpu.memory_space<vmem>>, %arg4: memref<1x128xf32, #tpu.memory_space<vmem>>) attributes {dimension_semantics = [#tpu.dimension_semantics<parallel>], iteration_bounds = array<i64: 1>, scalar_prefetch = 0 : i64, scratch_operands = 0 : i64, tpu.core_type = #tpu.core_type<tc>, window_params = [{transform_indices = @transform_0, window_bounds = array<i64: 1, 256>}, {pipeline_mode = #tpu.pipeline_mode<synchronous>, transform_indices = @transform_1, window_bounds = array<i64: 256, 128>}, {pipeline_mode = #tpu.pipeline_mode<synchronous>, transform_indices = @transform_2, window_bounds = array<i64: 1, 128>}, {transform_indices = @transform_3, window_bounds = array<i64: 1, 128>}]} {
    %c0 = arith.constant 0 : index
    %c0_0 = arith.constant 0 : index
    %0 = vector.load %arg1[%c0, %c0_0] : memref<1x256xf32, #tpu.memory_space<vmem>>, vector<1x256xf32>
    %c0_1 = arith.constant 0 : index
    %c0_2 = arith.constant 0 : index
    %1 = vector.load %arg2[%c0_1, %c0_2] : memref<256x128xf32, #tpu.memory_space<vmem>>, vector<256x128xf32>
    %cst = arith.constant dense<0.000000e+00> : vector<1x128xf32>
    %2 = tpu.matmul %0, %1, %cst {dimension_numbers = #tpu.dot_dimension_numbers<[1], [0], [0], [1], [0, 0, 1, 1], [], []>} : vector<1x256xf32>, vector<256x128xf32>, vector<1x128xf32> -> vector<1x128xf32>
    %c0_3 = arith.constant 0 : index
    %c0_4 = arith.constant 0 : index
    %3 = vector.load %arg3[%c0_3, %c0_4] : memref<1x128xf32, #tpu.memory_space<vmem>>, vector<1x128xf32>
    %4 = arith.addf %2, %3 : vector<1x128xf32>
    %c0_5 = arith.constant 0 : index
    %c0_6 = arith.constant 0 : index
    %5 = vector.load %arg4[%c0_5, %c0_6] : memref<1x128xf32, #tpu.memory_space<vmem>>, vector<1x128xf32>
    tpu.vector_store %arg4[%c0_5, %c0_6], %4 {strides = array<i32>} : memref<1x128xf32, #tpu.memory_space<vmem>>, vector<1x128xf32>,
    return
  }
  func.func @transform_0(%arg0: i32) -> (i32, i32) {
    %c0_i32 = arith.constant 0 : i32
    %c0_i32_0 = arith.constant 0 : i32
    return %arg0, %c0_i32 : i32, i32
  }
  func.func @transform_1(%arg0: i32) -> (i32, i32) {
    %c0_i32 = arith.constant 0 : i32
    %c0_i32_0 = arith.constant 0 : i32
    %c0_i32_1 = arith.constant 0 : i32
    return %c0_i32, %c0_i32_0 : i32, i32
  }
  func.func @transform_2(%arg0: i32) -> (i32, i32) {
    %c0_i32 = arith.constant 0 : i32
    %c0_i32_0 = arith.constant 0 : i32
    %c0_i32_1 = arith.constant 0 : i32
    return %c0_i32, %c0_i32_0 : i32, i32
  }
  func.func @transform_3(%arg0: i32) -> (i32, i32) {
    %c0_i32 = arith.constant 0 : i32
    %c0_i32_0 = arith.constant 0 : i32
    return %arg0, %c0_i32 : i32, i32
  }
}

</mosaic_0001>

<llo_original>
// kernel: tpu_custom_call.1
$region0: #{tpu_custom_call.1}
  #allocation0 [shape = 'u32[]', space=smem, size = 0x4, offset = 0x4, fixed_abs, tag = 'smem constant byte address 0x4 - core index']
  #allocation1 [shape = 'u32[144,128]{1,0:T(1,128)}', space=vmem, size = 0x12000, scoped, tag = 'internal scratch']
  %s0 = inlined_call_operand.hbm [shape: f32[1,256], index: 0, kind: input, shape index: {}]
  %s1 = inlined_call_operand.hbm [shape: f32[256,128], index: 1, kind: input, shape index: {}]
  %s2 = inlined_call_operand.vmem [shape: f32[1,128], index: 2, kind: input, shape index: {}]
  %s3 = inlined_call_operand.hbm [shape: f32[1,128], index: 3, kind: output, shape index: {}]
  %s4 = sld [smem:[#allocation0]]
  $region30: #{tpu_custom_call.1} parent=0
    _
  %s6 = ssub.s32 1, %s4
  %s7 = scalar_select 0, %s6, %s4
  $region1: #{tpu_custom_call.1} parent=0
    #allocation2 [shape = 'u8[1024]{0}', space=vmem, size = 0x400, scoped, tag = 'input window, operand 0, single buffered']
    #allocation3 [shape = 's32[1]{0}', space=sflag, size = 0x4, scoped, tag = 'scoped memory for tpu_custom_call.1']
    #allocation4 [shape = 's32[1]{0}', space=sflag, size = 0x4, scoped, tag = 'scoped memory for tpu_custom_call.1']
    #allocation5 [shape = 'u8[131072]{0}', space=vmem, size = 0x20000, scoped, tag = 'input window, operand 1, single buffered']
    #allocation6 [shape = 's32[1]{0}', space=sflag, size = 0x4, scoped, tag = 'scoped memory for tpu_custom_call.1']
    #allocation7 [shape = 'u8[512]{0}', space=vmem, size = 0x400, scoped, tag = 'output window, operand 0, single buffered']
    %8 = vsyncpa [#allocation3], 0
    %9 = vsyncpa [#allocation6], 0
    %10 = vsyncpa [#allocation4], 0
    // Predicated region
    $region2: #{tpu_custom_call.1} parent=1 // pred_check
      _
    $region3: #{tpu_custom_call.1} parent=1 // pred_check_branch
      %12 = sbr.rel (0) target = $region5
    $region4: #{tpu_custom_call.1} parent=1 // pred_region
      %s14 = ssub.s32 32, 32
      %15 = vsyncadd [#allocation3], %s14
      %s17 = sshll.u32 [#allocation2], 4
      %s18 = int_to_ptr.vmem [resolvable:$true] %s17
      %20 = dma.hbm_to_vmem [thread:$0]  %s0, 32, %s18, [#allocation3]
    $region5: #{tpu_custom_call.1} parent=1 // pred_fallthru
      _
    // Predicated region
    $region6: #{tpu_custom_call.1} parent=1 // pred_check
      _
    $region7: #{tpu_custom_call.1} parent=1 // pred_check_branch
      %22 = sbr.rel (0) target = $region9
    $region8: #{tpu_custom_call.1} parent=1 // pred_region
      %s24 = ssub.s32 4096, 4096
      %25 = vsyncadd [#allocation6], %s24
      %s26 = sshll.u32 [#allocation5], 4
      %s27 = int_to_ptr.vmem [resolvable:$true] %s26
      %32 = dma.hbm_to_vmem [thread:$0]  %s1, 4096, %s27, [#allocation6], 128, 128, 8
    $region9: #{tpu_custom_call.1} parent=1 // pred_fallthru
      _
    // Predicated region
    $region10: #{tpu_custom_call.1} parent=1 // pred_check
      _
    $region11: #{tpu_custom_call.1} parent=1 // pred_check_branch
      %34 = sbr.rel (0) target = $region13
    $region12: #{tpu_custom_call.1} parent=1 // pred_region
      _
    $region13: #{tpu_custom_call.1} parent=1 // pred_fallthru
      _
    // Predicated region
    $region14: #{tpu_custom_call.1} parent=1 // pred_check
      _
    $region15: #{tpu_custom_call.1} parent=1 // pred_check_branch
      %36 = sbr.rel (0) target = $region17
    $region16: #{tpu_custom_call.1} parent=1 // pred_region
      %37 = dma.done [#allocation3], 32
    $region17: #{tpu_custom_call.1} parent=1 // pred_fallthru
      _
    // Predicated region
    $region18: #{tpu_custom_call.1} parent=1 // pred_check
      _
    $region19: #{tpu_custom_call.1} parent=1 // pred_check_branch
      %39 = sbr.rel (0) target = $region21
    $region20: #{tpu_custom_call.1} parent=1 // pred_region
      %40 = dma.done [#allocation6], 4096
    $region21: #{tpu_custom_call.1} parent=1 // pred_fallthru
      _
    %v41 = vld [vmem:[#allocation2] sm:$0x3]
    %v42 = vld [vmem:[#allocation5] sm:$0xff]
    %v43 = vld [vmem:[#allocation5 + $0x8] sm:$0xff]
    %v44 = vld [vmem:[#allocation5 + $0x10] sm:$0xff]
    %v45 = vld [vmem:[#allocation5 + $0x18] sm:$0xff]
    %v46 = vld [vmem:[#allocation5 + $0x20] sm:$0xff]
    %v47 = vld [vmem:[#allocation5 + $0x28] sm:$0xff]
    %v48 = vld [vmem:[#allocation5 + $0x30] sm:$0xff]
    %v49 = vld [vmem:[#allocation5 + $0x38] sm:$0xff]
    %v50 = vld [vmem:[#allocation5 + $0x40] sm:$0xff]
    %v51 = vld [vmem:[#allocation5 + $0x48] sm:$0xff]
    %v52 = vld [vmem:[#allocation5 + $0x50] sm:$0xff]
    %v53 = vld [vmem:[#allocation5 + $0x58] sm:$0xff]
    %v54 = vld [vmem:[#allocation5 + $0x60] sm:$0xff]
    %v55 = vld [vmem:[#allocation5 + $0x68] sm:$0xff]
    %v56 = vld [vmem:[#allocation5 + $0x70] sm:$0xff]
    %v57 = vld [vmem:[#allocation5 + $0x78] sm:$0xff]
    %v58 = vld [vmem:[#allocation5 + $0x80] sm:$0xff]
    %v59 = vld [vmem:[#allocation5 + $0x88] sm:$0xff]
    %v60 = vld [vmem:[#allocation5 + $0x90] sm:$0xff]
    %v61 = vld [vmem:[#allocation5 + $0x98] sm:$0xff]
    %v62 = vld [vmem:[#allocation5 + $0xa0] sm:$0xff]
    %v63 = vld [vmem:[#allocation5 + $0xa8] sm:$0xff]
    %v64 = vld [vmem:[#allocation5 + $0xb0] sm:$0xff]
    %v65 = vld [vmem:[#allocation5 + $0xb8] sm:$0xff]
    %v66 = vld [vmem:[#allocation5 + $0xc0] sm:$0xff]
    %v67 = vld [vmem:[#allocation5 + $0xc8] sm:$0xff]
    %v68 = vld [vmem:[#allocation5 + $0xd0] sm:$0xff]
    %v69 = vld [vmem:[#allocation5 + $0xd8] sm:$0xff]
    %v70 = vld [vmem:[#allocation5 + $0xe0] sm:$0xff]
    %v71 = vld [vmem:[#allocation5 + $0xe8] sm:$0xff]
    %v72 = vld [vmem:[#allocation5 + $0xf0] sm:$0xff]
    %v73 = vld [vmem:[#allocation5 + $0xf8] sm:$0xff]
    %v74 = vld [vmem:[%s2] sm:$0x1]
    %v76 = vlaneseq
    %v77 = vshrl.u32 %v76, 7
    %v78 = vsub.s32 0, %v77
    %v79 = vrot.slane %v41, %v78
    %v80 = vlaneseq
    %v81 = vshrl.u32 %v80, 7
    %v82 = vsub.s32 1, %v81
    %v83 = vrot.slane %v41, %v82
    %86 = vmatprep.subr.mxu0 0.0
    %87 = vmatpush1.msra.mxu0 %v42
    %88 = vmatprep.subr.mxu0 0.0
    %89 = vmatpush1.msra.mxu0 %v43
    %90 = vmatprep.subr.mxu0 0.0
    %91 = vmatpush1.msra.mxu0 %v44
    %92 = vmatprep.subr.mxu0 0.0
    %93 = vmatpush1.msra.mxu0 %v45
    %94 = vmatprep.subr.mxu0 0.0
    %95 = vmatpush1.msra.mxu0 %v46
    %96 = vmatprep.subr.mxu0 0.0
    %97 = vmatpush1.msra.mxu0 %v47
    %98 = vmatprep.subr.mxu0 0.0
    %99 = vmatpush1.msra.mxu0 %v48
    %100 = vmatprep.subr.mxu0 0.0
    %101 = vmatpush1.msra.mxu0 %v49
    %102 = vmatprep.subr.mxu0 0.0
    %103 = vmatpush1.msra.mxu0 %v50
    %104 = vmatprep.subr.mxu0 0.0
    %105 = vmatpush1.msra.mxu0 %v51
    %106 = vmatprep.subr.mxu0 0.0
    %107 = vmatpush1.msra.mxu0 %v52
    %108 = vmatprep.subr.mxu0 0.0
    %109 = vmatpush1.msra.mxu0 %v53
    %110 = vmatprep.subr.mxu0 0.0
    %111 = vmatpush1.msra.mxu0 %v54
    %112 = vmatprep.subr.mxu0 0.0
    %113 = vmatpush1.msra.mxu0 %v55
    %114 = vmatprep.subr.mxu0 0.0
    %115 = vmatpush1.msra.mxu0 %v56
    %116 = vmatprep.subr.mxu0 0.0
    %117 = vmatpush1.msra.mxu0 %v57
    %118 = vmatprep.subr.mxu0 0.0
    %119 = vmatpush1.msra.mxu0 %v58
    %120 = vmatprep.subr.mxu0 0.0
    %121 = vmatpush1.msra.mxu0 %v59
    %122 = vmatprep.subr.mxu0 0.0
    %123 = vmatpush1.msra.mxu0 %v60
    %124 = vmatprep.subr.mxu0 0.0
    %125 = vmatpush1.msra.mxu0 %v61
    %126 = vmatprep.subr.mxu0 0.0
    %127 = vmatpush1.msra.mxu0 %v62
    %128 = vmatprep.subr.mxu0 0.0
    %129 = vmatpush1.msra.mxu0 %v63
    %130 = vmatprep.subr.mxu0 0.0
    %131 = vmatpush1.msra.mxu0 %v64
    %132 = vmatprep.subr.mxu0 0.0
    %133 = vmatpush1.msra.mxu0 %v65
    %134 = vmatprep.subr.mxu0 0.0
    %135 = vmatpush1.msra.mxu0 %v66
    %136 = vmatprep.subr.mxu0 0.0
    %137 = vmatpush1.msra.mxu0 %v67
    %138 = vmatprep.subr.mxu0 0.0
    %139 = vmatpush1.msra.mxu0 %v68
    %140 = vmatprep.subr.mxu0 0.0
    %141 = vmatpush1.msra.mxu0 %v69
    %142 = vmatprep.subr.mxu0 0.0
    %143 = vmatpush1.msra.mxu0 %v70
    %144 = vmatprep.subr.mxu0 0.0
    %145 = vmatpush1.msra.mxu0 %v71
    %146 = vmatprep.subr.mxu0 0.0
    %147 = vmatpush1.msra.mxu0 %v72
    %148 = vmatprep.subr.mxu0 0.0
    %149 = vmatpush1.msra.mxu0 %v73
    %150 = vmatprep.mubr.f32.mxu0 %v83
    %151 = vmatmul.mubr.f32.gmra.mrb[0].mxu0 %v79
    %v152 = vpop.f32.mrb[0].mxu0
    %v153 = vadd.f32 %v74, %v152
    %v154 = vpop.f32.mrb[0].mxu0
    %155 = vdwg.mxu0
    %156 = vst [vmem:[#allocation7] sm:$0x1] %v153
    // Predicated region
    $region22: #{tpu_custom_call.1} parent=1 // pred_check
      _
    $region23: #{tpu_custom_call.1} parent=1 // pred_check_branch
      %158 = sbr.rel (0) target = $region25
    $region24: #{tpu_custom_call.1} parent=1 // pred_region
      %s160 = ssub.s32 16, 16
      %161 = vsyncadd [#allocation4], %s160
      %s163 = sshll.u32 [#allocation7], 4
      %s164 = int_to_ptr.vmem [resolvable:$true] %s163
      %166 = dma.vmem_to_hbm [thread:$0]  %s164, 16, %s3, [#allocation4]
    $region25: #{tpu_custom_call.1} parent=1 // pred_fallthru
      _
    // Predicated region
    $region26: #{tpu_custom_call.1} parent=1 // pred_check
      _
    $region27: #{tpu_custom_call.1} parent=1 // pred_check_branch
      %168 = sbr.rel (0) target = $region29
    $region28: #{tpu_custom_call.1} parent=1 // pred_region
      %169 = dma.done [#allocation4], 16
    $region29: #{tpu_custom_call.1} parent=1 // pred_fallthru
      _
    %170 = vsyncpa [#allocation3], 1
    %171 = vsyncpa [#allocation6], 1
    %172 = vsyncpa [#allocation4], 1

</llo_original>
